<compile_context>
chip_gen: v6e
topology: v6e:2x2x1
jax: 0.10.0
libtpu: 0.0.40
codegen_flags: <defaults>
</compile_context>

<pallas_src>
import jax
import jax.numpy as jnp
from jax.experimental import pallas as pl
from jax.experimental.pallas import tpu as pltpu


def fcn_kernel(x_ref, wt_ref, b_ref, o_ref):
    x = x_ref[...]                     # (B, 2)  batch on sublanes, features on lanes
    wt = wt_ref[...]                   # (2, 2)  = (W2 @ W1).T, so y = x @ wt
    b = b_ref[...]                     # (1, 2)  = W2 @ b1 + b2

    # K=2 contraction on the VPU: two broadcast FMAs, no MXU involvement.
    y = x[:, 0:1] * wt[0:1, :] + x[:, 1:2] * wt[1:2, :] + b

    # Sigmoid (exp lands on the EUP slot).
    o_ref[...] = jax.nn.sigmoid(y).astype(o_ref.dtype)


def fcn_forward(x, w1, b1, w2, b2):
    """Forward pass of FCN: sigmoid(linear2(linear1(x))).

    Weights use PyTorch Linear convention: W (out_features, in_features), b (out_features,).
    """
    B, F = x.shape
    assert F == 2

    # Fold the two linears once, at trace time (exact):
    #   (x @ W1.T + b1) @ W2.T + b2 == x @ (W2 @ W1).T + (W2 @ b1 + b2)
    w_eff_t = (w2 @ w1).T.astype(x.dtype)                     # (2, 2) pre-transposed
    b_eff = (w2 @ b1 + b2).reshape(1, 2).astype(x.dtype)      # (1, 2)

    vmem = lambda: pl.BlockSpec(memory_space=pltpu.MemorySpace.VMEM)
    return pl.pallas_call(
        fcn_kernel,
        out_shape=jax.ShapeDtypeStruct((B, F), x.dtype),
        in_specs=[vmem(), vmem(), vmem()],
        out_specs=vmem(),
    )(x, w_eff_t, b_eff)

    # TODO(synk): if batch ever grows beyond toy size, switch to a lane-dense
    # (features-padded-to-128 or transposed) output layout and add a "parallel"
    # batch grid axis so v7x's second TensorCore is used.


if __name__ == "__main__":
    key = jax.random.PRNGKey(0)
    kx, k1w, k1b, k2w, k2b = jax.random.split(key, 5)

    batch = 8
    x = jax.random.normal(kx, (batch, 2), dtype=jnp.float32)

    # Deterministic parameter init (PyTorch Linear shapes: W (out,in), b (out,))
    w1 = jax.random.normal(k1w, (2, 2), dtype=jnp.float32) * 0.5
    b1 = jax.random.normal(k1b, (2,), dtype=jnp.float32) * 0.1
    w2 = jax.random.normal(k2w, (2, 2), dtype=jnp.float32) * 0.5
    b2 = jax.random.normal(k2b, (2,), dtype=jnp.float32) * 0.1

    out = fcn_forward(x, w1, b1, w2, b2)
    out = jax.block_until_ready(out)

    # Reference check in plain JAX (same math as the PyTorch module, unfolded)
    ref = jax.nn.sigmoid((x @ w1.T + b1) @ w2.T + b2)
    assert jnp.allclose(out, ref, atol=1e-5), "mismatch vs reference"

    print("KERNEL_OK")
</pallas_src>

<mosaic_0001>
module attributes {stable_mosaic.version = 11 : i64} {
  func.func @fcn_kernel(%arg0: memref<8x2xf32, #tpu.memory_space<vmem>>, %arg1: memref<2x2xf32, #tpu.memory_space<vmem>>, %arg2: memref<1x2xf32, #tpu.memory_space<vmem>>, %arg3: memref<8x2xf32, #tpu.memory_space<vmem>>) attributes {dimension_semantics = [], scalar_prefetch = 0 : i64, scratch_operands = 0 : i64, tpu.core_type = #tpu.core_type<tc>} {
    %c0 = arith.constant 0 : index
    %c0_0 = arith.constant 0 : index
    %0 = vector.load %arg0[%c0, %c0_0] : memref<8x2xf32, #tpu.memory_space<vmem>>, vector<8x2xf32>
    %c0_1 = arith.constant 0 : index
    %c0_2 = arith.constant 0 : index
    %1 = vector.load %arg1[%c0_1, %c0_2] : memref<2x2xf32, #tpu.memory_space<vmem>>, vector<2x2xf32>
    %c0_3 = arith.constant 0 : index
    %c0_4 = arith.constant 0 : index
    %2 = vector.load %arg2[%c0_3, %c0_4] : memref<1x2xf32, #tpu.memory_space<vmem>>, vector<1x2xf32>
    %3 = vector.extract_strided_slice %0 {offsets = [0, 0], sizes = [8, 1], strides = [1, 1]} : vector<8x2xf32> to vector<8x1xf32>
    %4 = vector.extract_strided_slice %1 {offsets = [0, 0], sizes = [1, 2], strides = [1, 1]} : vector<2x2xf32> to vector<1x2xf32>
    %5 = vector.broadcast %3 : vector<8x1xf32> to vector<8x2xf32>
    %6 = vector.broadcast %4 : vector<1x2xf32> to vector<8x2xf32>
    %7 = arith.mulf %5, %6 : vector<8x2xf32>
    %8 = vector.extract_strided_slice %0 {offsets = [0, 1], sizes = [8, 1], strides = [1, 1]} : vector<8x2xf32> to vector<8x1xf32>
    %9 = vector.extract_strided_slice %1 {offsets = [1, 0], sizes = [1, 2], strides = [1, 1]} : vector<2x2xf32> to vector<1x2xf32>
    %10 = vector.broadcast %8 : vector<8x1xf32> to vector<8x2xf32>
    %11 = vector.broadcast %9 : vector<1x2xf32> to vector<8x2xf32>
    %12 = arith.mulf %10, %11 : vector<8x2xf32>
    %13 = arith.addf %7, %12 : vector<8x2xf32>
    %14 = vector.broadcast %2 : vector<1x2xf32> to vector<8x2xf32>
    %15 = arith.addf %13, %14 : vector<8x2xf32>
    %16 = arith.negf %15 : vector<8x2xf32>
    %17 = math.exp %16 : vector<8x2xf32>
    %cst = arith.constant 1.000000e+00 : f32
    %18 = vector.broadcast %cst : f32 to vector<8x2xf32>
    %19 = arith.addf %18, %17 : vector<8x2xf32>
    %20 = arith.divf %18, %19 : vector<8x2xf32>
    %c0_5 = arith.constant 0 : index
    %c0_6 = arith.constant 0 : index
    %21 = vector.load %arg3[%c0_5, %c0_6] : memref<8x2xf32, #tpu.memory_space<vmem>>, vector<8x2xf32>
    tpu.vector_store %arg3[%c0_5, %c0_6], %20 {strides = array<i32>} : memref<8x2xf32, #tpu.memory_space<vmem>>, vector<8x2xf32>,
    return
  }
}

</mosaic_0001>

<llo_original>
// kernel: tpu_custom_call.1
$region0: #{tpu_custom_call.1}
  #allocation0 [shape = 'u32[]', space=smem, size = 0x4, offset = 0x4, fixed_abs, tag = 'smem constant byte address 0x4 - core index']
  #allocation1 [shape = 'u32[144,128]{1,0:T(1,128)}', space=vmem, size = 0x12000, scoped, tag = 'internal scratch']
  %s0 = inlined_call_operand.vmem [shape: f32[8,2], index: 0, kind: input, shape index: {}]
  %s1 = inlined_call_operand.vmem [shape: f32[2,2], index: 1, kind: input, shape index: {}]
  %s2 = inlined_call_operand.vmem [shape: f32[1,2], index: 2, kind: input, shape index: {}]
  %s3 = inlined_call_operand.vmem [shape: f32[8,2], index: 3, kind: output, shape index: {}]
  %s4 = sld [smem:[#allocation0]]
  $region22: #{tpu_custom_call.1} parent=0
    _
  %s6 = ssub.s32 1, %s4
  %s7 = scalar_select 0, %s6, %s4
  // Predicated region
  $region2: #{tpu_custom_call.1} parent=0 // pred_check
    _
  $region3: #{tpu_custom_call.1} parent=0 // pred_check_branch
    %9 = sbr.rel (0) target = $region5
  $region4: #{tpu_custom_call.1} parent=0 // pred_region
    _
  $region5: #{tpu_custom_call.1} parent=0 // pred_fallthru
    _
  // Predicated region
  $region6: #{tpu_custom_call.1} parent=0 // pred_check
    _
  $region7: #{tpu_custom_call.1} parent=0 // pred_check_branch
    %11 = sbr.rel (0) target = $region9
  $region8: #{tpu_custom_call.1} parent=0 // pred_region
    _
  $region9: #{tpu_custom_call.1} parent=0 // pred_fallthru
    _
  // Predicated region
  $region10: #{tpu_custom_call.1} parent=0 // pred_check
    _
  $region11: #{tpu_custom_call.1} parent=0 // pred_check_branch
    %13 = sbr.rel (0) target = $region13
  $region12: #{tpu_custom_call.1} parent=0 // pred_region
    _
  $region13: #{tpu_custom_call.1} parent=0 // pred_fallthru
    _
  %v14 = vld [vmem:[%s0] sm:$0xff]
  %v15 = vld [vmem:[%s1] sm:$0x3]
  %v16 = vld [vmem:[%s2] sm:$0x1]
  %18 = vset.pattern.permute.xlu0 0
  %19 = vperm.xlu0 %18, %v14
  %v20 = vpop.permute.xlu0 %19
  %v22 = vlaneseq
  %v23 = vshrl.u32 %v22, 7
  %v24 = vsub.s32 0, %v23
  %v25 = vrot.slane %v15, %v24
  %v26 = vmul.f32 %v20, %v25
  %27 = vset.pattern.permute.xlu0 1
  %28 = vperm.xlu0 %27, %v14
  %v29 = vpop.permute.xlu0 %28
  %v31 = vlaneseq
  %v32 = vshrl.u32 %v31, 7
  %v33 = vsub.s32 1, %v32
  %v34 = vrot.slane %v15, %v33
  %v35 = vmul.f32 %v29, %v34
  %v36 = vadd.f32 %v26, %v35
  %v38 = vlaneseq
  %v39 = vshrl.u32 %v38, 7
  %v40 = vsub.s32 0, %v39
  %v41 = vrot.slane %v16, %v40
  %v43 = vadd.f32 %v36, %v41
  %v44 = vxor.u32 %v43, 2147483648
  %v45 = vmul.f32 %v44, 1.442695
  %v46 = vpow.pop %v45
  %v47 = vadd.f32 %v46, 1.0
  %v48 = vrcp.pop %v47
  %v49 = vmul.f32 1.0, %v48
  %vm50 = vcmask 15360
  %51 = vst.msk [vmem:[%s3] sm:$0xff] %vm50, %v49
  // Predicated region
  $region14: #{tpu_custom_call.1} parent=0 // pred_check
    _
  $region15: #{tpu_custom_call.1} parent=0 // pred_check_branch
    %53 = sbr.rel (0) target = $region17
  $region16: #{tpu_custom_call.1} parent=0 // pred_region
    _
  $region17: #{tpu_custom_call.1} parent=0 // pred_fallthru
    _
  // Predicated region
  $region18: #{tpu_custom_call.1} parent=0 // pred_check
    _
  $region19: #{tpu_custom_call.1} parent=0 // pred_check_branch
    %55 = sbr.rel (0) target = $region21
  $region20: #{tpu_custom_call.1} parent=0 // pred_region
    _
  $region21: #{tpu_custom_call.1} parent=0 // pred_fallthru
    _

</llo_original>
